<compile_context>
chip_gen: v7x
topology: tpu7x:2x2x1
jax: 0.10.0
libtpu: 0.0.40
codegen_flags: <defaults>
</compile_context>

<pallas_src>
import functools

import numpy as np
import jax
import jax.numpy as jnp
from jax.experimental import pallas as pl
from jax.experimental.pallas import tpu as pltpu


_OUT_LANES = 128  # lane-dense packed scalar output: lane0 = loss, lane1 = cur_score


# ----------------------------- Pallas kernels ------------------------------ #

def _pack_scalars(loss_11, score_11):
    """Pack two (1,1) values into one lane-dense (1,128) row."""
    lane = jax.lax.broadcasted_iota(jnp.int32, (1, _OUT_LANES), dimension=1)
    return jnp.where(lane == 0, loss_11, jnp.where(lane == 1, score_11, 0.0))


def _sum_all(x):
    """(1,1) sum of a 2-D tile: sublane reduce then lane reduce (keepdims)."""
    return jnp.sum(jnp.sum(x, axis=0, keepdims=True), axis=1, keepdims=True)


def _scst_greedy_kernel(data_ref, greedy_ref, out_ref):
    """baseline_type == 'greedy'.

    data_ref:   (2, S, B) f32 VMEM; [0] = sample scores, [1] = sample logprobs,
                laid out (seq_per_img, batch) so batch fills the 128-lane axis.
    greedy_ref: (1, B) f32 VMEM greedy-baseline scores.
    out_ref:    (1, 128) f32 VMEM; lane0 = loss, lane1 = cur_score.
    """
    sc = data_ref[0]             # (S, B)
    logp = data_ref[1]           # (S, B)
    baseline = greedy_ref[...]   # (1, B), sublane-broadcast against (S, B)

    s, b = sc.shape
    inv_n = 1.0 / float(s * b)

    score_11 = _sum_all(sc) * inv_n                         # reward.mean() pre-baseline
    loss_11 = _sum_all(logp * (sc - baseline)) * (-inv_n)   # mean(-logp * reward)

    out_ref[...] = _pack_scalars(loss_11, score_11)


def _scst_sample_kernel(data_ref, out_ref):
    """baseline_type == 'sample' (leave-one-out baseline), folded algebraically:
       reward = sc - (row_sum - sc)/(S-1) = (S*sc - row_sum) / (S-1).
    """
    sc = data_ref[0]             # (S, B)
    logp = data_ref[1]           # (S, B)

    s, b = sc.shape
    inv_n = 1.0 / float(s * b)
    inv_sm1 = 1.0 / float(s - 1)

    col_sum = jnp.sum(sc, axis=0, keepdims=True)            # (1, B) sublane reduce
    score_11 = jnp.sum(col_sum, axis=1, keepdims=True) * inv_n

    reward = (sc * float(s) - col_sum) * inv_sm1             # no baseline temp, no divide
    loss_11 = _sum_all(logp * reward) * (-inv_n)

    out_ref[...] = _pack_scalars(loss_11, score_11)


# ------------------------------ wrapper (glue) ------------------------------ #

@functools.partial(jax.jit, static_argnames=("batch_size", "baseline_type"))
def scst_reward_loss_pallas(scores, sample_logprobs, *, batch_size,
                            baseline_type="greedy"):
    """Numeric part of ScstRewardCriterion.forward.

    scores: float32[N + B] (greedy baseline) or float32[N] (sample baseline),
            where N = batch_size * seq_per_img.
    sample_logprobs: float32[N]
    Returns (loss, cur_score) as scalar jnp arrays.
    """
    scores = jnp.asarray(scores, jnp.float32)
    logp = jnp.asarray(sample_logprobs, jnp.float32)
    n = logp.shape[0]
    b = int(batch_size)
    assert n % b == 0, "sample_logprobs length must be divisible by batch_size"
    s = n // b

    # (S, B): batch sits on the 128-lane axis; seq_per_img (~4-5) on sublanes.
    sample_sc = scores[:n].reshape(b, s).T                  # (S, B)
    logp_t = logp.reshape(b, s).T                           # (S, B)
    data = jnp.stack([sample_sc, logp_t], axis=0)           # (2, S, B) — one operand

    vmem = pl.BlockSpec(memory_space=pltpu.MemorySpace.VMEM)
    out_shape = jax.ShapeDtypeStruct((1, _OUT_LANES), jnp.float32)

    if baseline_type == "greedy":
        assert scores.shape[0] == n + b, "greedy baseline scores missing / mis-sized"
        greedy_sc = scores[n:].reshape(1, b)                # (1, B) lane-dense
        out = pl.pallas_call(
            _scst_greedy_kernel,
            out_shape=out_shape,
            in_specs=[vmem, vmem],
            out_specs=vmem,
        )(data, greedy_sc)
    elif baseline_type == "sample":
        assert s >= 2, "sample baseline requires seq_per_img >= 2"
        out = pl.pallas_call(
            _scst_sample_kernel,
            out_shape=out_shape,
            in_specs=[vmem],
            out_specs=vmem,
        )(data)
    else:
        raise ValueError(baseline_type)

    return out[0, 0], out[0, 1]


# ------------------- string glue (CIDEr placeholder, CPU) ------------------- #

def _wrap_sentence(s):
    r = s.strip()
    if r.endswith('.'):
        r = r[:-1]
    r += ' <eos>'
    return r


def _placeholder_caption_score(cand, refs):
    # TODO(synk): real CIDEr-D (tf-idf n-gram cosine similarity over a cached
    # corpus) is string processing with no Pallas equivalent; a deterministic
    # unigram-F1 placeholder stands in for it here.
    c = set(_wrap_sentence(cand).split())
    best = 0.0
    for ref in refs:
        r = set(_wrap_sentence(ref).split())
        inter = len(c & r)
        if inter == 0 or not c or not r:
            continue
        p = inter / len(c)
        rec = inter / len(r)
        best = max(best, 2.0 * p * rec / (p + rec))
    return best


class ScstRewardCriterionPallas:
    CIDER_REWARD_WEIGHT = 1.0

    def __init__(self, baseline_type='greedy'):
        assert baseline_type in ['greedy', 'sample']
        self.baseline_type = baseline_type
        self._cur_score = None

    def forward(self, gt_res, greedy_res, sample_res, sample_logprobs):
        batch_size = len(gt_res)
        sample_res_size = len(sample_res)
        seq_per_img = sample_res_size // batch_size

        gen_res = list(sample_res)
        gt_idx = [i // seq_per_img for i in range(sample_res_size)]
        if self.baseline_type == 'greedy':
            assert len(greedy_res) == batch_size
            gen_res.extend(greedy_res)
            gt_idx.extend(range(batch_size))

        scores = np.array(
            [self.CIDER_REWARD_WEIGHT *
             _placeholder_caption_score(gen_res[i], gt_res[gt_idx[i]])
             for i in range(len(gen_res))],
            dtype=np.float32)

        # async H2D copy of the CPU-computed scores before the (jitted) dispatch
        scores_dev = jax.device_put(scores)

        loss, score = scst_reward_loss_pallas(
            scores_dev, sample_logprobs,
            batch_size=batch_size, baseline_type=self.baseline_type)
        self._cur_score = score
        return loss, scores  # scores returned for the reference check below

    def get_score(self):
        return self._cur_score


# --------------------------- pure-numpy reference --------------------------- #

def _reference(scores, logp, batch_size, baseline_type):
    scores = np.asarray(scores, np.float64)
    logp = np.asarray(logp, np.float64)
    n = logp.shape[0]
    s = n // batch_size
    if baseline_type == 'greedy':
        baseline = scores[-batch_size:][:, np.newaxis]
    else:
        sc_ = scores.reshape(batch_size, s)
        baseline = (sc_.sum(1, keepdims=True) - sc_) / (sc_.shape[1] - 1)
    reward = scores[:n].reshape(batch_size, s)
    cur_score = reward.mean()
    reward = (reward - baseline).reshape(n)
    loss = np.mean(-logp * reward)
    return loss, cur_score


# ----------------------------------- main ----------------------------------- #

if __name__ == "__main__":
    # small shapes: batch=2 images, seq_per_img=4 sampled captions -> N=8
    batch_size = 2
    seq_per_img = 4
    n = batch_size * seq_per_img

    gt_res = [
        ["a dog runs in the park.", "a brown dog playing on grass"],
        ["a man rides a red bicycle.", "person riding a bike down the street"],
    ]
    greedy_res = [
        "a dog in the park",
        "a man rides a bicycle",
    ]
    sample_res = [
        "a dog runs on grass",
        "the brown dog in a park",
        "a cat sits on a sofa",
        "dog playing in the park.",
        "a man on a red bike",
        "person rides a bicycle down a street",
        "a red car on the road",
        "a man riding a bike.",
    ]

    key = jax.random.PRNGKey(0)
    # sequence-level log-probabilities of the sampled captions (negative)
    sample_logprobs = -jnp.abs(jax.random.normal(key, (n,), dtype=jnp.float32)) - 0.1

    ok = True
    for baseline_type in ("greedy", "sample"):
        crit = ScstRewardCriterionPallas(baseline_type=baseline_type)
        loss, scores = crit.forward(gt_res, greedy_res, sample_res, sample_logprobs)
        loss = jax.block_until_ready(loss)
        score = jax.block_until_ready(crit.get_score())

        ref_loss, ref_score = _reference(
            scores, np.asarray(sample_logprobs), batch_size, baseline_type)

        ok &= bool(np.allclose(np.asarray(loss), ref_loss, rtol=1e-5, atol=1e-6))
        ok &= bool(np.allclose(np.asarray(score), ref_score, rtol=1e-5, atol=1e-6))

    if ok:
        print("KERNEL_OK")
    else:
        print("KERNEL_MISMATCH")
</pallas_src>

<mosaic_0001>
module attributes {stable_mosaic.version = 11 : i64} {
  func.func @_scst_greedy_kernel(%arg0: memref<2x4x2xf32, #tpu.memory_space<vmem>>, %arg1: memref<1x2xf32, #tpu.memory_space<vmem>>, %arg2: memref<1x128xf32, #tpu.memory_space<vmem>>) attributes {dimension_semantics = [], scalar_prefetch = 0 : i64, scratch_operands = 0 : i64, tpu.core_type = #tpu.core_type<tc>} {
    %c0 = arith.constant 0 : index
    %c0_0 = arith.constant 0 : index
    %c0_1 = arith.constant 0 : index
    %0 = vector.load %arg0[%c0, %c0_0, %c0_1] : memref<2x4x2xf32, #tpu.memory_space<vmem>>, vector<1x4x2xf32>
    %1 = vector.shape_cast %0 : vector<1x4x2xf32> to vector<4x2xf32>
    %c1 = arith.constant 1 : index
    %c0_2 = arith.constant 0 : index
    %c0_3 = arith.constant 0 : index
    %2 = vector.load %arg0[%c1, %c0_2, %c0_3] : memref<2x4x2xf32, #tpu.memory_space<vmem>>, vector<1x4x2xf32>
    %3 = vector.shape_cast %2 : vector<1x4x2xf32> to vector<4x2xf32>
    %c0_4 = arith.constant 0 : index
    %c0_5 = arith.constant 0 : index
    %4 = vector.load %arg1[%c0_4, %c0_5] : memref<1x2xf32, #tpu.memory_space<vmem>>, vector<1x2xf32>
    %cst = arith.constant dense<0.000000e+00> : vector<2xf32>
    %5 = vector.multi_reduction <add>, %1, %cst [0] : vector<4x2xf32> to vector<2xf32>
    %6 = vector.shape_cast %5 : vector<2xf32> to vector<1x2xf32>
    %cst_6 = arith.constant dense<0.000000e+00> : vector<1xf32>
    %7 = vector.multi_reduction <add>, %6, %cst_6 [1] : vector<1x2xf32> to vector<1xf32>
    %8 = vector.shape_cast %7 : vector<1xf32> to vector<1x1xf32>
    %cst_7 = arith.constant 1.250000e-01 : f32
    %9 = vector.broadcast %cst_7 : f32 to vector<1x1xf32>
    %10 = arith.mulf %8, %9 : vector<1x1xf32>
    %11 = vector.broadcast %4 : vector<1x2xf32> to vector<4x2xf32>
    %12 = arith.subf %1, %11 : vector<4x2xf32>
    %13 = arith.mulf %3, %12 : vector<4x2xf32>
    %cst_8 = arith.constant dense<0.000000e+00> : vector<2xf32>
    %14 = vector.multi_reduction <add>, %13, %cst_8 [0] : vector<4x2xf32> to vector<2xf32>
    %15 = vector.shape_cast %14 : vector<2xf32> to vector<1x2xf32>
    %cst_9 = arith.constant dense<0.000000e+00> : vector<1xf32>
    %16 = vector.multi_reduction <add>, %15, %cst_9 [1] : vector<1x2xf32> to vector<1xf32>
    %17 = vector.shape_cast %16 : vector<1xf32> to vector<1x1xf32>
    %cst_10 = arith.constant -1.250000e-01 : f32
    %18 = vector.broadcast %cst_10 : f32 to vector<1x1xf32>
    %19 = arith.mulf %17, %18 : vector<1x1xf32>
    %20 = tpu.iota {dimensions = array<i32: 1>} : vector<1x128xi32>
    %c0_i32 = arith.constant 0 : i32
    %21 = vector.broadcast %c0_i32 : i32 to vector<1x128xi32>
    %22 = arith.cmpi eq, %20, %21 : vector<1x128xi32>
    %c1_i32 = arith.constant 1 : i32
    %23 = vector.broadcast %c1_i32 : i32 to vector<1x128xi32>
    %24 = arith.cmpi eq, %20, %23 : vector<1x128xi32>
    %cst_11 = arith.constant 0.000000e+00 : f32
    %25 = vector.shape_cast %10 : vector<1x1xf32> to vector<1x1xf32>
    %26 = vector.broadcast %25 : vector<1x1xf32> to vector<1x128xf32>
    %27 = vector.broadcast %cst_11 : f32 to vector<1x128xf32>
    %28 = arith.select %24, %26, %27 : vector<1x128xi1>, vector<1x128xf32>
    %29 = vector.shape_cast %19 : vector<1x1xf32> to vector<1x1xf32>
    %30 = vector.broadcast %29 : vector<1x1xf32> to vector<1x128xf32>
    %31 = arith.select %22, %30, %28 : vector<1x128xi1>, vector<1x128xf32>
    %c0_12 = arith.constant 0 : index
    %c0_13 = arith.constant 0 : index
    %32 = vector.load %arg2[%c0_12, %c0_13] : memref<1x128xf32, #tpu.memory_space<vmem>>, vector<1x128xf32>
    tpu.vector_store %arg2[%c0_12, %c0_13], %31 {strides = array<i32>} : memref<1x128xf32, #tpu.memory_space<vmem>>, vector<1x128xf32>,
    return
  }
}

</mosaic_0001>

<llo_original>
// kernel: scst_reward_loss_pallas.1
$region0: #{scst_reward_loss_pallas.1}
  #allocation0 [shape = 'u32[]', space=smem, size = 0x4, offset = 0x4, fixed_abs, tag = 'smem constant byte address 0x4 - core index']
  #allocation1 [shape = 'u32[144,128]{1,0:T(1,128)}', space=vmem, size = 0x12000, scoped, tag = 'internal scratch']
  %s0 = inlined_call_operand.vmem [shape: f32[2,4,2], index: 0, kind: input, shape index: {}]
  %s1 = inlined_call_operand.vmem [shape: f32[1,2], index: 1, kind: input, shape index: {}]
  %s2 = inlined_call_operand.vmem [shape: f32[1,128], index: 2, kind: output, shape index: {}]
  %s3 = sld [smem:[#allocation0]]
  $region18: #{scst_reward_loss_pallas.1} parent=0
    _
  %s5 = ssub.s32 1, %s3
  %s6 = scalar_select 0, %s5, %s3
  // Predicated region
  $region2: #{scst_reward_loss_pallas.1} parent=0 // pred_check
    _
  $region3: #{scst_reward_loss_pallas.1} parent=0 // pred_check_branch
    %8 = sbr.rel (0) target = $region5
  $region4: #{scst_reward_loss_pallas.1} parent=0 // pred_region
    _
  $region5: #{scst_reward_loss_pallas.1} parent=0 // pred_fallthru
    _
  // Predicated region
  $region6: #{scst_reward_loss_pallas.1} parent=0 // pred_check
    _
  $region7: #{scst_reward_loss_pallas.1} parent=0 // pred_check_branch
    %10 = sbr.rel (0) target = $region9
  $region8: #{scst_reward_loss_pallas.1} parent=0 // pred_region
    _
  $region9: #{scst_reward_loss_pallas.1} parent=0 // pred_fallthru
    _
  %v11 = vld [vmem:[%s0] sm:$0xf]
  %s12 = scalar_lea.vmem %s0, 4
  %v13 = vld [vmem:[%s12] sm:$0xf]
  %v14 = vld [vmem:[%s1] sm:$0x1]
  %vm15 = vcmask 11264
  %v16 = vsel %vm15, %v11, 0.0
  %v17 = vrot.slane %v16, 4
  %v18 = vadd.f32 %v16, %v17
  %v19 = vrot.slane %v18, 2
  %v20 = vadd.f32 %v18, %v19
  %v21 = vrot.slane %v20, 1
  %v22 = vadd.f32 %v20, %v21
  %vm23 = vcmask 15360
  %v24 = vsel %vm23, %v22, 0.0
  %25 = vadd.xlane.f32.xlu0 %v24
  %v26 = vpop.xlane.xlu0 %25
  %v27 = vmul.f32 %v26, 0.125
  %v29 = vlaneseq
  %v30 = vshrl.u32 %v29, 7
  %v31 = vsub.s32 0, %v30
  %v32 = vrot.slane %v14, %v31
  %v34 = vsub.f32 %v11, %v32
  %v35 = vmul.f32 %v13, %v34
  %v36 = vsel %vm15, %v35, 0.0
  %v37 = vrot.slane %v36, 4
  %v38 = vadd.f32 %v36, %v37
  %v39 = vrot.slane %v38, 2
  %v40 = vadd.f32 %v38, %v39
  %v41 = vrot.slane %v40, 1
  %v42 = vadd.f32 %v40, %v41
  %v43 = vsel %vm23, %v42, 0.0
  %44 = vadd.xlane.f32.xlu0 %v43
  %v45 = vpop.xlane.xlu0 %44
  %v46 = vmul.f32 %v45, -0.125
  %v47 = vlaneseq
  %v48 = vand.u32 %v47, 127
  %vm49 = vcmp.eq.s32.totalorder %v48, 0
  %vm50 = vcmp.eq.s32.totalorder %v48, 1
  %v51 = vsel %vm50, %v27, 0.0
  %v52 = vsel %vm49, %v46, %v51
  %53 = vst [vmem:[%s2] sm:$0x1] %v52
  // Predicated region
  $region10: #{scst_reward_loss_pallas.1} parent=0 // pred_check
    _
  $region11: #{scst_reward_loss_pallas.1} parent=0 // pred_check_branch
    %55 = sbr.rel (0) target = $region13
  $region12: #{scst_reward_loss_pallas.1} parent=0 // pred_region
    _
  $region13: #{scst_reward_loss_pallas.1} parent=0 // pred_fallthru
    _
  // Predicated region
  $region14: #{scst_reward_loss_pallas.1} parent=0 // pred_check
    _
  $region15: #{scst_reward_loss_pallas.1} parent=0 // pred_check_branch
    %57 = sbr.rel (0) target = $region17
  $region16: #{scst_reward_loss_pallas.1} parent=0 // pred_region
    _
  $region17: #{scst_reward_loss_pallas.1} parent=0 // pred_fallthru
    _

</llo_original>
